<compile_context>
chip_gen: v6e
topology: v6e:2x2x1
jax: 0.10.0
libtpu: 0.0.40
codegen_flags: <defaults>
</compile_context>

<pallas_src>
import jax
import jax.numpy as jnp
from jax import lax
from jax.experimental import pallas as pl
from jax.experimental.pallas import tpu as pltpu

B, DIM, H, W = 2, 4, 16, 16     # ResBlock(dim=4) at a small spatial size
KH, KW = 3, 3
EPS = 1e-5                      # nn.InstanceNorm2d default eps


def _make_resblock_kernel(batch, chans, height, width):
    bc = batch * chans
    hw = height * width
    # Tap order is row-major over (ky, kx) == (dy+1, dx+1); must match _build_mix_matrix.
    offsets = [(dy, dx) for dy in (-1, 0, 1) for dx in (-1, 0, 1)]

    def kernel(x_ref, m1_ref, m2_ref, o_ref, tap_ref):
        x = x_ref[...].astype(jnp.float32)                    # (B*C, H*W) lane-dense slab

        # Factored per-tap validity masks implementing the 1-pixel zero padding (and
        # killing the roll wrap-around): 2 y-compares + 2 x-compares total, AND'd per tap.
        p = lax.broadcasted_iota(jnp.int32, (bc, hw), 1)      # flat spatial index 0..HW-1
        if (width & (width - 1)) == 0:                        # power-of-two fast path
            yy = p >> (width.bit_length() - 1)
            xx = p & (width - 1)
        else:
            yy = p // width
            xx = p % width
        y_valid = {-1: yy >= 1, 0: None, 1: yy <= height - 2}
        x_valid = {-1: xx >= 1, 0: None, 1: xx <= width - 2}
        masks = []
        for dy, dx in offsets:
            my, mx = y_valid[dy], x_valid[dx]
            if my is None and mx is None:
                masks.append(None)                            # center tap: no select
            elif my is None:
                masks.append(mx)
            elif mx is None:
                masks.append(my)
            else:
                masks.append(my & mx)

        def conv3x3(inp, mix):
            # Gather the 9 taps with XLU rolls + zero masks.  Each tap is written straight
            # into its sublane slab of the VMEM scratch (only one tap live in vregs at a
            # time), then a single MXU matmul mixes channels for every pixel at once.
            for t, (dy, dx) in enumerate(offsets):
                s = dy * width + dx                           # gather offset in flat index
                shifted = inp if s == 0 else pltpu.roll(inp, shift=(-s) % hw, axis=1)
                tap = shifted if masks[t] is None else jnp.where(masks[t], shifted, 0.0)
                tap_ref[pl.ds(t * bc, bc), :] = tap           # sublane-aligned full store
            return jnp.dot(mix, tap_ref[...], preferred_element_type=jnp.float32)
            # Conv bias intentionally omitted: cancelled exactly by the following
            # non-affine InstanceNorm (mean subtraction absorbs the per-channel constant).

        def instance_norm(y):
            # One-pass statistics (biased variance), lane reductions per (batch, channel).
            inv_n = 1.0 / hw
            mean = jnp.sum(y, axis=1, keepdims=True) * inv_n
            ex2 = jnp.sum(y * y, axis=1, keepdims=True) * inv_n
            var = jnp.maximum(ex2 - mean * mean, 0.0)         # guard fp cancellation
            return (y - mean) * lax.rsqrt(var + EPS)

        y1 = conv3x3(x, m1_ref[...])                          # ConvBlock 1 (bias folded)
        y1 = jnp.maximum(instance_norm(y1), 0.0)              #   IN + ReLU
        y2 = conv3x3(y1, m2_ref[...])                         # ConvBlock 2 (bias folded)
        y2 = instance_norm(y2)                                #   IN (no activation)
        o_ref[...] = (y2 + x).astype(o_ref.dtype)             # residual add

    return kernel


def _build_mix_matrix(w_oihw, batch):
    """(C_out, C_in, KH, KW) conv weight -> (B*C_out, KH*KW*B*C_in) block-diag matrix.

    Column block t (row-major over (ky, kx)) maps the t-th shifted/masked input slab
    (B*C_in sublane rows) to the B*C_out output rows, block-diagonally over the batch.
    """
    _, _, kh, kw = w_oihw.shape
    eye = jnp.eye(batch, dtype=w_oihw.dtype)
    blocks = [jnp.kron(eye, w_oihw[:, :, ky, kx])             # (B*C_out, B*C_in) per tap
              for ky in range(kh) for kx in range(kw)]
    return jnp.concatenate(blocks, axis=1)


@jax.jit
def resblock(x_nchw, w1, w2):
    """x_nchw: (B, C, H, W); w: (C_out, C_in, 3, 3) OIHW.

    Conv biases are not needed: each conv is followed by a non-affine InstanceNorm, which
    cancels any per-channel constant exactly (see the reference check in __main__).
    """
    b, c, h, w = x_nchw.shape
    bc, hw = b * c, h * w
    x2 = x_nchw.reshape(bc, hw)                               # lane-dense, no transpose
    m1 = _build_mix_matrix(w1, b)
    m2 = _build_mix_matrix(w2, b)
    out2 = pl.pallas_call(
        _make_resblock_kernel(b, c, h, w),
        out_shape=jax.ShapeDtypeStruct((bc, hw), x_nchw.dtype),
        in_specs=[pl.BlockSpec(memory_space=pltpu.MemorySpace.VMEM)] * 3,
        out_specs=pl.BlockSpec(memory_space=pltpu.MemorySpace.VMEM),
        scratch_shapes=[pltpu.VMEM((KH * KW * bc, hw), jnp.float32)],  # shared tap slab
    )(x2, m1, m2)
    return out2.reshape(b, c, h, w)                           # back to NCHW (pure reshape)


def resblock_ref(x, w1, b1, w2, b2):
    """Pure-JAX reference of the PyTorch forward (with conv biases, for a sanity check)."""
    def conv(z, wgt, bias):
        y = lax.conv_general_dilated(
            z, wgt, window_strides=(1, 1), padding=((1, 1), (1, 1)),
            dimension_numbers=('NCHW', 'OIHW', 'NCHW'),
            precision=lax.Precision.HIGHEST)
        return y + bias.reshape(1, -1, 1, 1)

    def inorm(y):
        m = jnp.mean(y, axis=(2, 3), keepdims=True)
        v = jnp.mean((y - m) ** 2, axis=(2, 3), keepdims=True)
        return (y - m) * lax.rsqrt(v + EPS)

    h1 = jax.nn.relu(inorm(conv(x, w1, b1)))
    h2 = inorm(conv(h1, w2, b2))
    return h2 + x


if __name__ == "__main__":
    key = jax.random.PRNGKey(0)
    kx, k1, k2, kb1, kb2 = jax.random.split(key, 5)

    # PyTorch-style NCHW input and OIHW conv weights (+ biases, used by the reference
    # only: they are provably cancelled by the non-affine InstanceNorm).
    x = jax.random.normal(kx, (B, DIM, H, W), jnp.float32)
    bound = 1.0 / (DIM * KH * KW) ** 0.5                      # Conv2d default init range
    w1 = jax.random.uniform(k1, (DIM, DIM, KH, KW), jnp.float32, -bound, bound)
    w2 = jax.random.uniform(k2, (DIM, DIM, KH, KW), jnp.float32, -bound, bound)
    b1 = jax.random.uniform(kb1, (DIM,), jnp.float32, -bound, bound)
    b2 = jax.random.uniform(kb2, (DIM,), jnp.float32, -bound, bound)

    out = jax.block_until_ready(resblock(x, w1, w2))
    ref = resblock_ref(x, w1, b1, w2, b2)

    assert out.shape == (B, DIM, H, W)
    max_err = float(jnp.max(jnp.abs(out - ref)))
    assert max_err < 1e-3, f"mismatch vs reference: {max_err}"

    print("KERNEL_OK")
</pallas_src>

<mosaic_0001>
module attributes {stable_mosaic.version = 11 : i64} {
  func.func @kernel(%arg0: memref<8x256xf32, #tpu.memory_space<vmem>>, %arg1: memref<8x72xf32, #tpu.memory_space<vmem>>, %arg2: memref<8x72xf32, #tpu.memory_space<vmem>>, %arg3: memref<8x256xf32, #tpu.memory_space<vmem>>, %arg4: memref<72x256xf32, #tpu.memory_space<vmem>>) attributes {dimension_semantics = [], scalar_prefetch = 0 : i64, scratch_operands = 1 : i64, tpu.core_type = #tpu.core_type<tc>} {
    %c0 = arith.constant 0 : index
    %c0_0 = arith.constant 0 : index
    %0 = vector.load %arg0[%c0, %c0_0] : memref<8x256xf32, #tpu.memory_space<vmem>>, vector<8x256xf32>
    %1 = tpu.iota {dimensions = array<i32: 1>} : vector<8x256xi32>
    %c4_i32 = arith.constant 4 : i32
    %2 = vector.broadcast %c4_i32 : i32 to vector<8x256xi32>
    %3 = arith.shrsi %1, %2 : vector<8x256xi32>
    %c15_i32 = arith.constant 15 : i32
    %4 = vector.broadcast %c15_i32 : i32 to vector<8x256xi32>
    %5 = arith.andi %1, %4 : vector<8x256xi32>
    %c1_i32 = arith.constant 1 : i32
    %6 = vector.broadcast %c1_i32 : i32 to vector<8x256xi32>
    %7 = arith.cmpi sge, %3, %6 : vector<8x256xi32>
    %c14_i32 = arith.constant 14 : i32
    %8 = vector.broadcast %c14_i32 : i32 to vector<8x256xi32>
    %9 = arith.cmpi sle, %3, %8 : vector<8x256xi32>
    %c1_i32_1 = arith.constant 1 : i32
    %10 = vector.broadcast %c1_i32_1 : i32 to vector<8x256xi32>
    %11 = arith.cmpi sge, %5, %10 : vector<8x256xi32>
    %c14_i32_2 = arith.constant 14 : i32
    %12 = vector.broadcast %c14_i32_2 : i32 to vector<8x256xi32>
    %13 = arith.cmpi sle, %5, %12 : vector<8x256xi32>
    %14 = arith.andi %7, %11 : vector<8x256xi1>
    %15 = arith.andi %7, %13 : vector<8x256xi1>
    %16 = arith.andi %9, %11 : vector<8x256xi1>
    %17 = arith.andi %9, %13 : vector<8x256xi1>
    %c0_3 = arith.constant 0 : index
    %c0_4 = arith.constant 0 : index
    %18 = vector.load %arg1[%c0_3, %c0_4] : memref<8x72xf32, #tpu.memory_space<vmem>>, vector<8x72xf32>
    %c17_i32 = arith.constant 17 : i32
    %19 = tpu.dynamic_rotate %0 by %c17_i32 dim 1 : vector<8x256xf32>, i32 -> vector<8x256xf32>
    %cst = arith.constant 0.000000e+00 : f32
    %20 = vector.broadcast %cst : f32 to vector<8x256xf32>
    %21 = arith.select %14, %19, %20 : vector<8x256xi1>, vector<8x256xf32>
    %c0_5 = arith.constant 0 : index
    %c0_6 = arith.constant 0 : index
    %22 = vector.load %arg4[%c0_5, %c0_6] : memref<72x256xf32, #tpu.memory_space<vmem>>, vector<8x256xf32>
    tpu.vector_store %arg4[%c0_5, %c0_6], %21 {strides = array<i32>} : memref<72x256xf32, #tpu.memory_space<vmem>>, vector<8x256xf32>,
    %c16_i32 = arith.constant 16 : i32
    %23 = tpu.dynamic_rotate %0 by %c16_i32 dim 1 : vector<8x256xf32>, i32 -> vector<8x256xf32>
    %cst_7 = arith.constant 0.000000e+00 : f32
    %24 = vector.broadcast %cst_7 : f32 to vector<8x256xf32>
    %25 = arith.select %7, %23, %24 : vector<8x256xi1>, vector<8x256xf32>
    %c8 = arith.constant 8 : index
    %c0_8 = arith.constant 0 : index
    %26 = vector.load %arg4[%c8, %c0_8] : memref<72x256xf32, #tpu.memory_space<vmem>>, vector<8x256xf32>
    tpu.vector_store %arg4[%c8, %c0_8], %25 {strides = array<i32>} : memref<72x256xf32, #tpu.memory_space<vmem>>, vector<8x256xf32>,
    %c15_i32_9 = arith.constant 15 : i32
    %27 = tpu.dynamic_rotate %0 by %c15_i32_9 dim 1 : vector<8x256xf32>, i32 -> vector<8x256xf32>
    %cst_10 = arith.constant 0.000000e+00 : f32
    %28 = vector.broadcast %cst_10 : f32 to vector<8x256xf32>
    %29 = arith.select %15, %27, %28 : vector<8x256xi1>, vector<8x256xf32>
    %c16 = arith.constant 16 : index
    %c0_11 = arith.constant 0 : index
    %30 = vector.load %arg4[%c16, %c0_11] : memref<72x256xf32, #tpu.memory_space<vmem>>, vector<8x256xf32>
    tpu.vector_store %arg4[%c16, %c0_11], %29 {strides = array<i32>} : memref<72x256xf32, #tpu.memory_space<vmem>>, vector<8x256xf32>,
    %c1_i32_12 = arith.constant 1 : i32
    %31 = tpu.dynamic_rotate %0 by %c1_i32_12 dim 1 : vector<8x256xf32>, i32 -> vector<8x256xf32>
    %cst_13 = arith.constant 0.000000e+00 : f32
    %32 = vector.broadcast %cst_13 : f32 to vector<8x256xf32>
    %33 = arith.select %11, %31, %32 : vector<8x256xi1>, vector<8x256xf32>
    %c24 = arith.constant 24 : index
    %c0_14 = arith.constant 0 : index
    %34 = vector.load %arg4[%c24, %c0_14] : memref<72x256xf32, #tpu.memory_space<vmem>>, vector<8x256xf32>
    tpu.vector_store %arg4[%c24, %c0_14], %33 {strides = array<i32>} : memref<72x256xf32, #tpu.memory_space<vmem>>, vector<8x256xf32>,
    %c32 = arith.constant 32 : index
    %c0_15 = arith.constant 0 : index
    %35 = vector.load %arg4[%c32, %c0_15] : memref<72x256xf32, #tpu.memory_space<vmem>>, vector<8x256xf32>
    tpu.vector_store %arg4[%c32, %c0_15], %0 {strides = array<i32>} : memref<72x256xf32, #tpu.memory_space<vmem>>, vector<8x256xf32>,
    %c255_i32 = arith.constant 255 : i32
    %36 = tpu.dynamic_rotate %0 by %c255_i32 dim 1 : vector<8x256xf32>, i32 -> vector<8x256xf32>
    %cst_16 = arith.constant 0.000000e+00 : f32
    %37 = vector.broadcast %cst_16 : f32 to vector<8x256xf32>
    %38 = arith.select %13, %36, %37 : vector<8x256xi1>, vector<8x256xf32>
    %c40 = arith.constant 40 : index
    %c0_17 = arith.constant 0 : index
    %39 = vector.load %arg4[%c40, %c0_17] : memref<72x256xf32, #tpu.memory_space<vmem>>, vector<8x256xf32>
    tpu.vector_store %arg4[%c40, %c0_17], %38 {strides = array<i32>} : memref<72x256xf32, #tpu.memory_space<vmem>>, vector<8x256xf32>,
    %c241_i32 = arith.constant 241 : i32
    %40 = tpu.dynamic_rotate %0 by %c241_i32 dim 1 : vector<8x256xf32>, i32 -> vector<8x256xf32>
    %cst_18 = arith.constant 0.000000e+00 : f32
    %41 = vector.broadcast %cst_18 : f32 to vector<8x256xf32>
    %42 = arith.select %16, %40, %41 : vector<8x256xi1>, vector<8x256xf32>
    %c48 = arith.constant 48 : index
    %c0_19 = arith.constant 0 : index
    %43 = vector.load %arg4[%c48, %c0_19] : memref<72x256xf32, #tpu.memory_space<vmem>>, vector<8x256xf32>
    tpu.vector_store %arg4[%c48, %c0_19], %42 {strides = array<i32>} : memref<72x256xf32, #tpu.memory_space<vmem>>, vector<8x256xf32>,
    %c240_i32 = arith.constant 240 : i32
    %44 = tpu.dynamic_rotate %0 by %c240_i32 dim 1 : vector<8x256xf32>, i32 -> vector<8x256xf32>
    %cst_20 = arith.constant 0.000000e+00 : f32
    %45 = vector.broadcast %cst_20 : f32 to vector<8x256xf32>
    %46 = arith.select %9, %44, %45 : vector<8x256xi1>, vector<8x256xf32>
    %c56 = arith.constant 56 : index
    %c0_21 = arith.constant 0 : index
    %47 = vector.load %arg4[%c56, %c0_21] : memref<72x256xf32, #tpu.memory_space<vmem>>, vector<8x256xf32>
    tpu.vector_store %arg4[%c56, %c0_21], %46 {strides = array<i32>} : memref<72x256xf32, #tpu.memory_space<vmem>>, vector<8x256xf32>,
    %c239_i32 = arith.constant 239 : i32
    %48 = tpu.dynamic_rotate %0 by %c239_i32 dim 1 : vector<8x256xf32>, i32 -> vector<8x256xf32>
    %cst_22 = arith.constant 0.000000e+00 : f32
    %49 = vector.broadcast %cst_22 : f32 to vector<8x256xf32>
    %50 = arith.select %17, %48, %49 : vector<8x256xi1>, vector<8x256xf32>
    %c64 = arith.constant 64 : index
    %c0_23 = arith.constant 0 : index
    %51 = vector.load %arg4[%c64, %c0_23] : memref<72x256xf32, #tpu.memory_space<vmem>>, vector<8x256xf32>
    tpu.vector_store %arg4[%c64, %c0_23], %50 {strides = array<i32>} : memref<72x256xf32, #tpu.memory_space<vmem>>, vector<8x256xf32>,
    %c0_24 = arith.constant 0 : index
    %c0_25 = arith.constant 0 : index
    %52 = vector.load %arg4[%c0_24, %c0_25] : memref<72x256xf32, #tpu.memory_space<vmem>>, vector<72x256xf32>
    %cst_26 = arith.constant dense<0.000000e+00> : vector<8x256xf32>
    %53 = tpu.matmul %18, %52, %cst_26 {dimension_numbers = #tpu.dot_dimension_numbers<[1], [0], [0], [1], [0, 0, 1, 1], [], []>} : vector<8x72xf32>, vector<72x256xf32>, vector<8x256xf32> -> vector<8x256xf32>
    %cst_27 = arith.constant dense<0.000000e+00> : vector<8xf32>
    %54 = vector.multi_reduction <add>, %53, %cst_27 [1] : vector<8x256xf32> to vector<8xf32>
    %55 = vector.shape_cast %54 : vector<8xf32> to vector<8x1xf32>
    %cst_28 = arith.constant 3.906250e-03 : f32
    %56 = vector.broadcast %cst_28 : f32 to vector<8x1xf32>
    %57 = arith.mulf %55, %56 : vector<8x1xf32>
    %58 = arith.mulf %53, %53 : vector<8x256xf32>
    %cst_29 = arith.constant dense<0.000000e+00> : vector<8xf32>
    %59 = vector.multi_reduction <add>, %58, %cst_29 [1] : vector<8x256xf32> to vector<8xf32>
    %60 = vector.shape_cast %59 : vector<8xf32> to vector<8x1xf32>
    %cst_30 = arith.constant 3.906250e-03 : f32
    %61 = vector.broadcast %cst_30 : f32 to vector<8x1xf32>
    %62 = arith.mulf %60, %61 : vector<8x1xf32>
    %63 = arith.mulf %57, %57 : vector<8x1xf32>
    %64 = arith.subf %62, %63 : vector<8x1xf32>
    %cst_31 = arith.constant 0.000000e+00 : f32
    %65 = vector.broadcast %cst_31 : f32 to vector<8x1xf32>
    %66 = arith.maximumf %64, %65 : vector<8x1xf32>
    %67 = vector.broadcast %57 : vector<8x1xf32> to vector<8x256xf32>
    %68 = arith.subf %53, %67 : vector<8x256xf32>
    %cst_32 = arith.constant 9.99999974E-6 : f32
    %69 = vector.broadcast %cst_32 : f32 to vector<8x1xf32>
    %70 = arith.addf %66, %69 : vector<8x1xf32>
    %71 = math.rsqrt %70 : vector<8x1xf32>
    %72 = vector.broadcast %71 : vector<8x1xf32> to vector<8x256xf32>
    %73 = arith.mulf %68, %72 : vector<8x256xf32>
    %cst_33 = arith.constant 0.000000e+00 : f32
    %74 = vector.broadcast %cst_33 : f32 to vector<8x256xf32>
    %75 = arith.maximumf %73, %74 : vector<8x256xf32>
    %c0_34 = arith.constant 0 : index
    %c0_35 = arith.constant 0 : index
    %76 = vector.load %arg2[%c0_34, %c0_35] : memref<8x72xf32, #tpu.memory_space<vmem>>, vector<8x72xf32>
    %c17_i32_36 = arith.constant 17 : i32
    %77 = tpu.dynamic_rotate %75 by %c17_i32_36 dim 1 : vector<8x256xf32>, i32 -> vector<8x256xf32>
    %cst_37 = arith.constant 0.000000e+00 : f32
    %78 = vector.broadcast %cst_37 : f32 to vector<8x256xf32>
    %79 = arith.select %14, %77, %78 : vector<8x256xi1>, vector<8x256xf32>
    %c0_38 = arith.constant 0 : index
    %c0_39 = arith.constant 0 : index
    %80 = vector.load %arg4[%c0_38, %c0_39] : memref<72x256xf32, #tpu.memory_space<vmem>>, vector<8x256xf32>
    tpu.vector_store %arg4[%c0_38, %c0_39], %79 {strides = array<i32>} : memref<72x256xf32, #tpu.memory_space<vmem>>, vector<8x256xf32>,
    %c16_i32_40 = arith.constant 16 : i32
    %81 = tpu.dynamic_rotate %75 by %c16_i32_40 dim 1 : vector<8x256xf32>, i32 -> vector<8x256xf32>
    %cst_41 = arith.constant 0.000000e+00 : f32
    %82 = vector.broadcast %cst_41 : f32 to vector<8x256xf32>
    %83 = arith.select %7, %81, %82 : vector<8x256xi1>, vector<8x256xf32>
    %c8_42 = arith.constant 8 : index
    %c0_43 = arith.constant 0 : index
    %84 = vector.load %arg4[%c8_42, %c0_43] : memref<72x256xf32, #tpu.memory_space<vmem>>, vector<8x256xf32>
    tpu.vector_store %arg4[%c8_42, %c0_43], %83 {strides = array<i32>} : memref<72x256xf32, #tpu.memory_space<vmem>>, vector<8x256xf32>,
    %c15_i32_44 = arith.constant 15 : i32
    %85 = tpu.dynamic_rotate %75 by %c15_i32_44 dim 1 : vector<8x256xf32>, i32 -> vector<8x256xf32>
    %cst_45 = arith.constant 0.000000e+00 : f32
    %86 = vector.broadcast %cst_45 : f32 to vector<8x256xf32>
    %87 = arith.select %15, %85, %86 : vector<8x256xi1>, vector<8x256xf32>
    %c16_46 = arith.constant 16 : index
    %c0_47 = arith.constant 0 : index
    %88 = vector.load %arg4[%c16_46, %c0_47] : memref<72x256xf32, #tpu.memory_space<vmem>>, vector<8x256xf32>
    tpu.vector_store %arg4[%c16_46, %c0_47], %87 {strides = array<i32>} : memref<72x256xf32, #tpu.memory_space<vmem>>, vector<8x256xf32>,
    %c1_i32_48 = arith.constant 1 : i32
    %89 = tpu.dynamic_rotate %75 by %c1_i32_48 dim 1 : vector<8x256xf32>, i32 -> vector<8x256xf32>
    %cst_49 = arith.constant 0.000000e+00 : f32
    %90 = vector.broadcast %cst_49 : f32 to vector<8x256xf32>
    %91 = arith.select %11, %89, %90 : vector<8x256xi1>, vector<8x256xf32>
    %c24_50 = arith.constant 24 : index
    %c0_51 = arith.constant 0 : index
    %92 = vector.load %arg4[%c24_50, %c0_51] : memref<72x256xf32, #tpu.memory_space<vmem>>, vector<8x256xf32>
    tpu.vector_store %arg4[%c24_50, %c0_51], %91 {strides = array<i32>} : memref<72x256xf32, #tpu.memory_space<vmem>>, vector<8x256xf32>,
    %c32_52 = arith.constant 32 : index
    %c0_53 = arith.constant 0 : index
    %93 = vector.load %arg4[%c32_52, %c0_53] : memref<72x256xf32, #tpu.memory_space<vmem>>, vector<8x256xf32>
    tpu.vector_store %arg4[%c32_52, %c0_53], %75 {strides = array<i32>} : memref<72x256xf32, #tpu.memory_space<vmem>>, vector<8x256xf32>,
    %c255_i32_54 = arith.constant 255 : i32
    %94 = tpu.dynamic_rotate %75 by %c255_i32_54 dim 1 : vector<8x256xf32>, i32 -> vector<8x256xf32>
    %cst_55 = arith.constant 0.000000e+00 : f32
    %95 = vector.broadcast %cst_55 : f32 to vector<8x256xf32>
    %96 = arith.select %13, %94, %95 : vector<8x256xi1>, vector<8x256xf32>
    %c40_56 = arith.constant 40 : index
    %c0_57 = arith.constant 0 : index
    %97 = vector.load %arg4[%c40_56, %c0_57] : memref<72x256xf32, #tpu.memory_space<vmem>>, vector<8x256xf32>
    tpu.vector_store %arg4[%c40_56, %c0_57], %96 {strides = array<i32>} : memref<72x256xf32, #tpu.memory_space<vmem>>, vector<8x256xf32>,
    %c241_i32_58 = arith.constant 241 : i32
    %98 = tpu.dynamic_rotate %75 by %c241_i32_58 dim 1 : vector<8x256xf32>, i32 -> vector<8x256xf32>
    %cst_59 = arith.constant 0.000000e+00 : f32
    %99 = vector.broadcast %cst_59 : f32 to vector<8x256xf32>
    %100 = arith.select %16, %98, %99 : vector<8x256xi1>, vector<8x256xf32>
    %c48_60 = arith.constant 48 : index
    %c0_61 = arith.constant 0 : index
    %101 = vector.load %arg4[%c48_60, %c0_61] : memref<72x256xf32, #tpu.memory_space<vmem>>, vector<8x256xf32>
    tpu.vector_store %arg4[%c48_60, %c0_61], %100 {strides = array<i32>} : memref<72x256xf32, #tpu.memory_space<vmem>>, vector<8x256xf32>,
    %c240_i32_62 = arith.constant 240 : i32
    %102 = tpu.dynamic_rotate %75 by %c240_i32_62 dim 1 : vector<8x256xf32>, i32 -> vector<8x256xf32>
    %cst_63 = arith.constant 0.000000e+00 : f32
    %103 = vector.broadcast %cst_63 : f32 to vector<8x256xf32>
    %104 = arith.select %9, %102, %103 : vector<8x256xi1>, vector<8x256xf32>
    %c56_64 = arith.constant 56 : index
    %c0_65 = arith.constant 0 : index
    %105 = vector.load %arg4[%c56_64, %c0_65] : memref<72x256xf32, #tpu.memory_space<vmem>>, vector<8x256xf32>
    tpu.vector_store %arg4[%c56_64, %c0_65], %104 {strides = array<i32>} : memref<72x256xf32, #tpu.memory_space<vmem>>, vector<8x256xf32>,
    %c239_i32_66 = arith.constant 239 : i32
    %106 = tpu.dynamic_rotate %75 by %c239_i32_66 dim 1 : vector<8x256xf32>, i32 -> vector<8x256xf32>
    %cst_67 = arith.constant 0.000000e+00 : f32
    %107 = vector.broadcast %cst_67 : f32 to vector<8x256xf32>
    %108 = arith.select %17, %106, %107 : vector<8x256xi1>, vector<8x256xf32>
    %c64_68 = arith.constant 64 : index
    %c0_69 = arith.constant 0 : index
    %109 = vector.load %arg4[%c64_68, %c0_69] : memref<72x256xf32, #tpu.memory_space<vmem>>, vector<8x256xf32>
    tpu.vector_store %arg4[%c64_68, %c0_69], %108 {strides = array<i32>} : memref<72x256xf32, #tpu.memory_space<vmem>>, vector<8x256xf32>,
    %c0_70 = arith.constant 0 : index
    %c0_71 = arith.constant 0 : index
    %110 = vector.load %arg4[%c0_70, %c0_71] : memref<72x256xf32, #tpu.memory_space<vmem>>, vector<72x256xf32>
    %cst_72 = arith.constant dense<0.000000e+00> : vector<8x256xf32>
    %111 = tpu.matmul %76, %110, %cst_72 {dimension_numbers = #tpu.dot_dimension_numbers<[1], [0], [0], [1], [0, 0, 1, 1], [], []>} : vector<8x72xf32>, vector<72x256xf32>, vector<8x256xf32> -> vector<8x256xf32>
    %cst_73 = arith.constant dense<0.000000e+00> : vector<8xf32>
    %112 = vector.multi_reduction <add>, %111, %cst_73 [1] : vector<8x256xf32> to vector<8xf32>
    %113 = vector.shape_cast %112 : vector<8xf32> to vector<8x1xf32>
    %cst_74 = arith.constant 3.906250e-03 : f32
    %114 = vector.broadcast %cst_74 : f32 to vector<8x1xf32>
    %115 = arith.mulf %113, %114 : vector<8x1xf32>
    %116 = arith.mulf %111, %111 : vector<8x256xf32>
    %cst_75 = arith.constant dense<0.000000e+00> : vector<8xf32>
    %117 = vector.multi_reduction <add>, %116, %cst_75 [1] : vector<8x256xf32> to vector<8xf32>
    %118 = vector.shape_cast %117 : vector<8xf32> to vector<8x1xf32>
    %cst_76 = arith.constant 3.906250e-03 : f32
    %119 = vector.broadcast %cst_76 : f32 to vector<8x1xf32>
    %120 = arith.mulf %118, %119 : vector<8x1xf32>
    %121 = arith.mulf %115, %115 : vector<8x1xf32>
    %122 = arith.subf %120, %121 : vector<8x1xf32>
    %cst_77 = arith.constant 0.000000e+00 : f32
    %123 = vector.broadcast %cst_77 : f32 to vector<8x1xf32>
    %124 = arith.maximumf %122, %123 : vector<8x1xf32>
    %125 = vector.broadcast %115 : vector<8x1xf32> to vector<8x256xf32>
    %126 = arith.subf %111, %125 : vector<8x256xf32>
    %cst_78 = arith.constant 9.99999974E-6 : f32
    %127 = vector.broadcast %cst_78 : f32 to vector<8x1xf32>
    %128 = arith.addf %124, %127 : vector<8x1xf32>
    %129 = math.rsqrt %128 : vector<8x1xf32>
    %130 = vector.broadcast %129 : vector<8x1xf32> to vector<8x256xf32>
    %131 = arith.mulf %126, %130 : vector<8x256xf32>
    %132 = arith.addf %131, %0 : vector<8x256xf32>
    %c0_79 = arith.constant 0 : index
    %c0_80 = arith.constant 0 : index
    %133 = vector.load %arg3[%c0_79, %c0_80] : memref<8x256xf32, #tpu.memory_space<vmem>>, vector<8x256xf32>
    tpu.vector_store %arg3[%c0_79, %c0_80], %132 {strides = array<i32>} : memref<8x256xf32, #tpu.memory_space<vmem>>, vector<8x256xf32>,
    return
  }
}

</mosaic_0001>

<llo_original>
// kernel: resblock.1
$region0: #{resblock.1}
  #allocation0 [shape = 'u32[]', space=smem, size = 0x4, offset = 0x4, fixed_abs, tag = 'smem constant byte address 0x4 - core index']
  #allocation1 [shape = 'u32[144,128]{1,0:T(1,128)}', space=vmem, size = 0x12000, scoped, tag = 'internal scratch']
  #allocation2 [shape = 'f32[72,256]{1,0:T(8,128)}', space=vmem, size = 0x12000, scoped, tag = 'scratch operand']
  %s0 = inlined_call_operand.vmem [shape: f32[8,256], index: 0, kind: input, shape index: {}]
  %s1 = inlined_call_operand.vmem [shape: f32[8,72], index: 1, kind: input, shape index: {}]
  %s2 = inlined_call_operand.vmem [shape: f32[8,72], index: 2, kind: input, shape index: {}]
  %s3 = inlined_call_operand.vmem [shape: f32[8,256], index: 3, kind: output, shape index: {}]
  %s4 = sld [smem:[#allocation0]]
  $region22: #{resblock.1} parent=0
    _
  %s6 = ssub.s32 1, %s4
  %s7 = scalar_select 0, %s6, %s4
  // Predicated region
  $region2: #{resblock.1} parent=0 // pred_check
    _
  $region3: #{resblock.1} parent=0 // pred_check_branch
    %9 = sbr.rel (0) target = $region5
  $region4: #{resblock.1} parent=0 // pred_region
    _
  $region5: #{resblock.1} parent=0 // pred_fallthru
    _
  // Predicated region
  $region6: #{resblock.1} parent=0 // pred_check
    _
  $region7: #{resblock.1} parent=0 // pred_check_branch
    %11 = sbr.rel (0) target = $region9
  $region8: #{resblock.1} parent=0 // pred_region
    _
  $region9: #{resblock.1} parent=0 // pred_fallthru
    _
  // Predicated region
  $region10: #{resblock.1} parent=0 // pred_check
    _
  $region11: #{resblock.1} parent=0 // pred_check_branch
    %13 = sbr.rel (0) target = $region13
  $region12: #{resblock.1} parent=0 // pred_region
    _
  $region13: #{resblock.1} parent=0 // pred_fallthru
    _
  %v14 = vld [vmem:[%s0] sm:$0xff]
  %v15 = vld [vmem:[%s0 + $0x8] sm:$0xff]
  %v16 = vlaneseq
  %v17 = vand.u32 %v16, 127
  %v18 = vadd.s32 %v17, 128
  %v19 = vshra.s32 %v17, 4
  %v20 = vshra.s32 %v18, 4
  %v21 = vand.u32 %v17, 15
  %v22 = vand.u32 %v18, 15
  %vm23 = vcmp.ge.s32.totalorder %v19, 1
  %vm24 = vcmp.ge.s32.totalorder %v20, 1
  %vm25 = vcmp.le.s32.totalorder %v19, 14
  %vm26 = vcmp.le.s32.totalorder %v20, 14
  %vm27 = vcmp.ge.s32.totalorder %v21, 1
  %vm28 = vcmp.ge.s32.totalorder %v22, 1
  %vm29 = vcmp.le.s32.totalorder %v21, 14
  %vm30 = vcmp.le.s32.totalorder %v22, 14
  %vm31 = vmand %vm23, %vm27
  %vm32 = vmand %vm24, %vm28
  %vm33 = vmand %vm23, %vm29
  %vm34 = vmand %vm24, %vm30
  %vm35 = vmand %vm25, %vm27
  %vm36 = vmand %vm26, %vm28
  %vm37 = vmand %vm25, %vm29
  %vm38 = vmand %vm26, %vm30
  %v39 = vld [vmem:[%s1] sm:$0xff]
  %40 = vrot.lane.b32.xlu0 %v14, 17
  %v41 = vpop.permute.xlu0 %40
  %42 = vrot.lane.b32.xlu0 %v15, 17
  %v43 = vpop.permute.xlu0 %42
  %vm44 = vcmp.lt.s32.totalorder %v17, 17
  %v45 = vsel %vm44, %v41, %v43
  %v46 = vsel %vm44, %v43, %v41
  %v47 = vsel %vm31, %v46, 0.0
  %v48 = vsel %vm32, %v45, 0.0
  %49 = vst [vmem:[#allocation2] sm:$0xff] %v47
  %50 = vst [vmem:[#allocation2 + $0x8] sm:$0xff] %v48
  %51 = vrot.lane.b32.xlu0 %v14, 16
  %v52 = vpop.permute.xlu0 %51
  %53 = vrot.lane.b32.xlu0 %v15, 16
  %v54 = vpop.permute.xlu0 %53
  %vm55 = vcmp.lt.s32.totalorder %v17, 16
  %v56 = vsel %vm55, %v52, %v54
  %v57 = vsel %vm55, %v54, %v52
  %v58 = vsel %vm23, %v57, 0.0
  %v59 = vsel %vm24, %v56, 0.0
  %60 = vst [vmem:[#allocation2 + $0x10] sm:$0xff] %v58
  %61 = vst [vmem:[#allocation2 + $0x18] sm:$0xff] %v59
  %62 = vrot.lane.b32.xlu0 %v14, 15
  %v63 = vpop.permute.xlu0 %62
  %64 = vrot.lane.b32.xlu0 %v15, 15
  %v65 = vpop.permute.xlu0 %64
  %vm66 = vcmp.lt.s32.totalorder %v17, 15
  %v67 = vsel %vm66, %v63, %v65
  %v68 = vsel %vm66, %v65, %v63
  %v69 = vsel %vm33, %v68, 0.0
  %v70 = vsel %vm34, %v67, 0.0
  %71 = vst [vmem:[#allocation2 + $0x20] sm:$0xff] %v69
  %72 = vst [vmem:[#allocation2 + $0x28] sm:$0xff] %v70
  %73 = vrot.lane.b32.xlu0 %v14, 1
  %v74 = vpop.permute.xlu0 %73
  %75 = vrot.lane.b32.xlu0 %v15, 1
  %v76 = vpop.permute.xlu0 %75
  %vm77 = vcmp.lt.s32.totalorder %v17, 1
  %v78 = vsel %vm77, %v74, %v76
  %v79 = vsel %vm77, %v76, %v74
  %v80 = vsel %vm27, %v79, 0.0
  %v81 = vsel %vm28, %v78, 0.0
  %82 = vst [vmem:[#allocation2 + $0x30] sm:$0xff] %v80
  %83 = vst [vmem:[#allocation2 + $0x38] sm:$0xff] %v81
  %84 = vst [vmem:[#allocation2 + $0x40] sm:$0xff] %v14
  %85 = vst [vmem:[#allocation2 + $0x48] sm:$0xff] %v15
  %86 = vrot.lane.b32.xlu0 %v14, 127
  %v87 = vpop.permute.xlu0 %86
  %88 = vrot.lane.b32.xlu0 %v15, 127
  %v89 = vpop.permute.xlu0 %88
  %vm90 = vcmp.lt.s32.totalorder %v17, 127
  %v91 = vsel %vm90, %v87, %v89
  %v92 = vsel %vm90, %v89, %v87
  %v93 = vsel %vm29, %v91, 0.0
  %v94 = vsel %vm30, %v92, 0.0
  %95 = vst [vmem:[#allocation2 + $0x50] sm:$0xff] %v93
  %96 = vst [vmem:[#allocation2 + $0x58] sm:$0xff] %v94
  %97 = vrot.lane.b32.xlu0 %v14, 113
  %v98 = vpop.permute.xlu0 %97
  %99 = vrot.lane.b32.xlu0 %v15, 113
  %v100 = vpop.permute.xlu0 %99
  %vm101 = vcmp.lt.s32.totalorder %v17, 113
  %v102 = vsel %vm101, %v98, %v100
  %v103 = vsel %vm101, %v100, %v98
  %v104 = vsel %vm35, %v102, 0.0
  %v105 = vsel %vm36, %v103, 0.0
  %106 = vst [vmem:[#allocation2 + $0x60] sm:$0xff] %v104
  %107 = vst [vmem:[#allocation2 + $0x68] sm:$0xff] %v105
  %108 = vrot.lane.b32.xlu0 %v14, 112
  %v109 = vpop.permute.xlu0 %108
  %110 = vrot.lane.b32.xlu0 %v15, 112
  %v111 = vpop.permute.xlu0 %110
  %vm112 = vcmp.lt.s32.totalorder %v17, 112
  %v113 = vsel %vm112, %v109, %v111
  %v114 = vsel %vm112, %v111, %v109
  %v115 = vsel %vm25, %v113, 0.0
  %v116 = vsel %vm26, %v114, 0.0
  %117 = vst [vmem:[#allocation2 + $0x70] sm:$0xff] %v115
  %118 = vst [vmem:[#allocation2 + $0x78] sm:$0xff] %v116
  %119 = vrot.lane.b32.xlu0 %v14, 111
  %v120 = vpop.permute.xlu0 %119
  %121 = vrot.lane.b32.xlu0 %v15, 111
  %v122 = vpop.permute.xlu0 %121
  %vm123 = vcmp.lt.s32.totalorder %v17, 111
  %v124 = vsel %vm123, %v120, %v122
  %v125 = vsel %vm123, %v122, %v120
  %v126 = vsel %vm37, %v124, 0.0
  %v127 = vsel %vm38, %v125, 0.0
  %128 = vst [vmem:[#allocation2 + $0x80] sm:$0xff] %v126
  %129 = vst [vmem:[#allocation2 + $0x88] sm:$0xff] %v127
  %v130 = vld [vmem:[#allocation2] sm:$0xff]
  %v131 = vld [vmem:[#allocation2 + $0x8] sm:$0xff]
  %v132 = vld [vmem:[#allocation2 + $0x10] sm:$0xff]
  %v133 = vld [vmem:[#allocation2 + $0x18] sm:$0xff]
  %v134 = vld [vmem:[#allocation2 + $0x20] sm:$0xff]
  %v135 = vld [vmem:[#allocation2 + $0x28] sm:$0xff]
  %v136 = vld [vmem:[#allocation2 + $0x30] sm:$0xff]
  %v137 = vld [vmem:[#allocation2 + $0x38] sm:$0xff]
  %v138 = vld [vmem:[#allocation2 + $0x40] sm:$0xff]
  %v139 = vld [vmem:[#allocation2 + $0x48] sm:$0xff]
  %v140 = vld [vmem:[#allocation2 + $0x50] sm:$0xff]
  %v141 = vld [vmem:[#allocation2 + $0x58] sm:$0xff]
  %v142 = vld [vmem:[#allocation2 + $0x60] sm:$0xff]
  %v143 = vld [vmem:[#allocation2 + $0x68] sm:$0xff]
  %v144 = vld [vmem:[#allocation2 + $0x70] sm:$0xff]
  %v145 = vld [vmem:[#allocation2 + $0x78] sm:$0xff]
  %v146 = vld [vmem:[#allocation2 + $0x80] sm:$0xff]
  %v147 = vld [vmem:[#allocation2 + $0x88] sm:$0xff]
  %vm148 = vcmask 588800
  %v150 = vsel %vm148, %v39, 0
  %152 = vmatprep.subr.mxu0 0.0
  %153 = vmatpush1.msra.mxu0 0.0
  %154 = vmatprep.subr.mxu0 0.0
  %155 = vmatpush1.msra.mxu0 0.0
  %156 = vmatprep.subr.mxu0 0.0
  %157 = vmatpush1.msra.mxu0 0.0
  %158 = vmatprep.subr.mxu0 0.0
  %159 = vmatpush1.msra.mxu0 0.0
  %160 = vmatprep.subr.mxu0 0.0
  %161 = vmatpush1.msra.mxu0 0.0
  %162 = vmatprep.subr.mxu0 0.0
  %163 = vmatpush1.msra.mxu0 0.0
  %164 = vmatprep.subr.mxu0 0.0
  %165 = vmatpush1.msra.mxu0 0.0
  %166 = vmatprep.subr.mxu0 %v147
  %167 = vmatpush1.msra.mxu0 %v146
  %168 = vmatprep.subr.mxu0 %v145
  %169 = vmatpush1.msra.mxu0 %v144
  %170 = vmatprep.subr.mxu0 %v143
  %171 = vmatpush1.msra.mxu0 %v142
  %172 = vmatprep.subr.mxu0 %v141
  %173 = vmatpush1.msra.mxu0 %v140
  %174 = vmatprep.subr.mxu0 %v139
  %175 = vmatpush1.msra.mxu0 %v138
  %176 = vmatprep.subr.mxu0 %v137
  %177 = vmatpush1.msra.mxu0 %v136
  %178 = vmatprep.subr.mxu0 %v135
  %179 = vmatpush1.msra.mxu0 %v134
  %180 = vmatprep.subr.mxu0 %v133
  %181 = vmatpush1.msra.mxu0 %v132
  %182 = vmatprep.subr.mxu0 %v131
  %183 = vmatpush1.msra.mxu0 %v130
  %184 = vmatprep.subr.mxu0 0.0
  %185 = vmatpush2.msra.mxu0 0.0
  %186 = vmatprep.subr.mxu0 0.0
  %187 = vmatpush2.msra.mxu0 0.0
  %188 = vmatprep.subr.mxu0 0.0
  %189 = vmatpush2.msra.mxu0 0.0
  %190 = vmatprep.subr.mxu0 0.0
  %191 = vmatpush2.msra.mxu0 0.0
  %192 = vmatprep.subr.mxu0 0.0
  %193 = vmatpush2.msra.mxu0 0.0
  %194 = vmatprep.subr.mxu0 0.0
  %195 = vmatpush2.msra.mxu0 0.0
  %196 = vmatprep.subr.mxu0 0.0
  %197 = vmatpush2.msra.mxu0 0.0
  %198 = vmatprep.subr.mxu0 0.0
  %199 = vmatpush2.msra.mxu0 0.0
  %200 = vmatprep.subr.mxu0 0.0
  %201 = vmatpush2.msra.mxu0 0.0
  %202 = vmatprep.subr.mxu0 0.0
  %203 = vmatpush2.msra.mxu0 0.0
  %204 = vmatprep.subr.mxu0 0.0
  %205 = vmatpush2.msra.mxu0 0.0
  %206 = vmatprep.subr.mxu0 0.0
  %207 = vmatpush2.msra.mxu0 0.0
  %208 = vmatprep.subr.mxu0 0.0
  %209 = vmatpush2.msra.mxu0 0.0
  %210 = vmatprep.subr.mxu0 0.0
  %211 = vmatpush2.msra.mxu0 0.0
  %212 = vmatprep.subr.mxu0 0.0
  %213 = vmatpush2.msra.mxu0 0.0
  %214 = vmatprep.subr.mxu0 0.0
  %215 = vmatpush2.msra.mxu0 0.0
  %216 = vmatprep.mubr.f32.mxu0 0.0
  %217 = vmatmul.mubr.f32.gmra.mxu0 %v150
  %v218 = vpop.f32.mrf.mxu0
  %v219 = vadd.f32 0.0, %v218
  %v220 = vpop.f32.mrf.mxu0
  %v221 = vadd.f32 0.0, %v220
  %222 = vdwg.mxu0
  %v223 = vadd.f32 %v219, %v221
  %224 = vadd.xlane.f32.xlu0 %v223
  %v225 = vpop.xlane.xlu0 %224
  %v226 = vmul.f32 %v225, 0.00390625
  %v227 = vmul.f32 %v219, %v219
  %v228 = vmul.f32 %v221, %v221
  %v229 = vadd.f32 %v227, %v228
  %230 = vadd.xlane.f32.xlu0 %v229
  %v231 = vpop.xlane.xlu0 %230
  %v232 = vmul.f32 %v231, 0.00390625
  %v233 = vmul.f32 %v226, %v226
  %v234 = vsub.f32 %v232, %v233
  %v235 = vmax.f32 %v234, 0.0
  %v236 = vsub.f32 %v219, %v226
  %v237 = vsub.f32 %v221, %v226
  %v238 = vadd.f32 %v235, 1e-05
  %v239 = vrsqrt.pop %v238
  %v240 = vmul.f32 %v236, %v239
  %v241 = vmul.f32 %v237, %v239
  %v242 = vmax.f32 %v240, 0.0
  %v243 = vmax.f32 %v241, 0.0
  %v244 = vld [vmem:[%s2] sm:$0xff]
  %245 = vrot.lane.b32.xlu0 %v242, 17
  %v246 = vpop.permute.xlu0 %245
  %247 = vrot.lane.b32.xlu0 %v243, 17
  %v248 = vpop.permute.xlu0 %247
  %v249 = vsel %vm44, %v246, %v248
  %v250 = vsel %vm44, %v248, %v246
  %v251 = vsel %vm31, %v250, 0.0
  %v252 = vsel %vm32, %v249, 0.0
  %253 = vst [vmem:[#allocation2] sm:$0xff] %v251
  %254 = vst [vmem:[#allocation2 + $0x8] sm:$0xff] %v252
  %255 = vrot.lane.b32.xlu0 %v242, 16
  %v256 = vpop.permute.xlu0 %255
  %257 = vrot.lane.b32.xlu0 %v243, 16
  %v258 = vpop.permute.xlu0 %257
  %v259 = vsel %vm55, %v256, %v258
  %v260 = vsel %vm55, %v258, %v256
  %v261 = vsel %vm23, %v260, 0.0
  %v262 = vsel %vm24, %v259, 0.0
  %263 = vst [vmem:[#allocation2 + $0x10] sm:$0xff] %v261
  %264 = vst [vmem:[#allocation2 + $0x18] sm:$0xff] %v262
  %265 = vrot.lane.b32.xlu0 %v242, 15
  %v266 = vpop.permute.xlu0 %265
  %267 = vrot.lane.b32.xlu0 %v243, 15
  %v268 = vpop.permute.xlu0 %267
  %v269 = vsel %vm66, %v266, %v268
  %v270 = vsel %vm66, %v268, %v266
  %v271 = vsel %vm33, %v270, 0.0
  %v272 = vsel %vm34, %v269, 0.0
  %273 = vst [vmem:[#allocation2 + $0x20] sm:$0xff] %v271
  %274 = vst [vmem:[#allocation2 + $0x28] sm:$0xff] %v272
  %275 = vrot.lane.b32.xlu0 %v242, 1
  %v276 = vpop.permute.xlu0 %275
  %277 = vrot.lane.b32.xlu0 %v243, 1
  %v278 = vpop.permute.xlu0 %277
  %v279 = vsel %vm77, %v276, %v278
  %v280 = vsel %vm77, %v278, %v276
  %v281 = vsel %vm27, %v280, 0.0
  %v282 = vsel %vm28, %v279, 0.0
  %283 = vst [vmem:[#allocation2 + $0x30] sm:$0xff] %v281
  %284 = vst [vmem:[#allocation2 + $0x38] sm:$0xff] %v282
  %285 = vst [vmem:[#allocation2 + $0x40] sm:$0xff] %v242
  %286 = vst [vmem:[#allocation2 + $0x48] sm:$0xff] %v243
  %287 = vrot.lane.b32.xlu0 %v242, 127
  %v288 = vpop.permute.xlu0 %287
  %289 = vrot.lane.b32.xlu0 %v243, 127
  %v290 = vpop.permute.xlu0 %289
  %v291 = vsel %vm90, %v288, %v290
  %v292 = vsel %vm90, %v290, %v288
  %v293 = vsel %vm29, %v291, 0.0
  %v294 = vsel %vm30, %v292, 0.0
  %295 = vst [vmem:[#allocation2 + $0x50] sm:$0xff] %v293
  %296 = vst [vmem:[#allocation2 + $0x58] sm:$0xff] %v294
  %297 = vrot.lane.b32.xlu0 %v242, 113
  %v298 = vpop.permute.xlu0 %297
  %299 = vrot.lane.b32.xlu0 %v243, 113
  %v300 = vpop.permute.xlu0 %299
  %v301 = vsel %vm101, %v298, %v300
  %v302 = vsel %vm101, %v300, %v298
  %v303 = vsel %vm35, %v301, 0.0
  %v304 = vsel %vm36, %v302, 0.0
  %305 = vst [vmem:[#allocation2 + $0x60] sm:$0xff] %v303
  %306 = vst [vmem:[#allocation2 + $0x68] sm:$0xff] %v304
  %307 = vrot.lane.b32.xlu0 %v242, 112
  %v308 = vpop.permute.xlu0 %307
  %309 = vrot.lane.b32.xlu0 %v243, 112
  %v310 = vpop.permute.xlu0 %309
  %v311 = vsel %vm112, %v308, %v310
  %v312 = vsel %vm112, %v310, %v308
  %v313 = vsel %vm25, %v311, 0.0
  %v314 = vsel %vm26, %v312, 0.0
  %315 = vst [vmem:[#allocation2 + $0x70] sm:$0xff] %v313
  %316 = vst [vmem:[#allocation2 + $0x78] sm:$0xff] %v314
  %317 = vrot.lane.b32.xlu0 %v242, 111
  %v318 = vpop.permute.xlu0 %317
  %319 = vrot.lane.b32.xlu0 %v243, 111
  %v320 = vpop.permute.xlu0 %319
  %v321 = vsel %vm123, %v318, %v320
  %v322 = vsel %vm123, %v320, %v318
  %v323 = vsel %vm37, %v321, 0.0
  %v324 = vsel %vm38, %v322, 0.0
  %325 = vst [vmem:[#allocation2 + $0x80] sm:$0xff] %v323
  %326 = vst [vmem:[#allocation2 + $0x88] sm:$0xff] %v324
  %v327 = vld [vmem:[#allocation2] sm:$0xff]
  %v328 = vld [vmem:[#allocation2 + $0x8] sm:$0xff]
  %v329 = vld [vmem:[#allocation2 + $0x10] sm:$0xff]
  %v330 = vld [vmem:[#allocation2 + $0x18] sm:$0xff]
  %v331 = vld [vmem:[#allocation2 + $0x20] sm:$0xff]
  %v332 = vld [vmem:[#allocation2 + $0x28] sm:$0xff]
  %v333 = vld [vmem:[#allocation2 + $0x30] sm:$0xff]
  %v334 = vld [vmem:[#allocation2 + $0x38] sm:$0xff]
  %v335 = vld [vmem:[#allocation2 + $0x40] sm:$0xff]
  %v336 = vld [vmem:[#allocation2 + $0x48] sm:$0xff]
  %v337 = vld [vmem:[#allocation2 + $0x50] sm:$0xff]
  %v338 = vld [vmem:[#allocation2 + $0x58] sm:$0xff]
  %v339 = vld [vmem:[#allocation2 + $0x60] sm:$0xff]
  %v340 = vld [vmem:[#allocation2 + $0x68] sm:$0xff]
  %v341 = vld [vmem:[#allocation2 + $0x70] sm:$0xff]
  %v342 = vld [vmem:[#allocation2 + $0x78] sm:$0xff]
  %v343 = vld [vmem:[#allocation2 + $0x80] sm:$0xff]
  %v344 = vld [vmem:[#allocation2 + $0x88] sm:$0xff]
  %v346 = vsel %vm148, %v244, 0
  %348 = vmatprep.subr.mxu0 0.0
  %349 = vmatpush1.msra.mxu0 0.0
  %350 = vmatprep.subr.mxu0 0.0
  %351 = vmatpush1.msra.mxu0 0.0
  %352 = vmatprep.subr.mxu0 0.0
  %353 = vmatpush1.msra.mxu0 0.0
  %354 = vmatprep.subr.mxu0 0.0
  %355 = vmatpush1.msra.mxu0 0.0
  %356 = vmatprep.subr.mxu0 0.0
  %357 = vmatpush1.msra.mxu0 0.0
  %358 = vmatprep.subr.mxu0 0.0
  %359 = vmatpush1.msra.mxu0 0.0
  %360 = vmatprep.subr.mxu0 0.0
  %361 = vmatpush1.msra.mxu0 0.0
  %362 = vmatprep.subr.mxu0 %v344
  %363 = vmatpush1.msra.mxu0 %v343
  %364 = vmatprep.subr.mxu0 %v342
  %365 = vmatpush1.msra.mxu0 %v341
  %366 = vmatprep.subr.mxu0 %v340
  %367 = vmatpush1.msra.mxu0 %v339
  %368 = vmatprep.subr.mxu0 %v338
  %369 = vmatpush1.msra.mxu0 %v337
  %370 = vmatprep.subr.mxu0 %v336
  %371 = vmatpush1.msra.mxu0 %v335
  %372 = vmatprep.subr.mxu0 %v334
  %373 = vmatpush1.msra.mxu0 %v333
  %374 = vmatprep.subr.mxu0 %v332
  %375 = vmatpush1.msra.mxu0 %v331
  %376 = vmatprep.subr.mxu0 %v330
  %377 = vmatpush1.msra.mxu0 %v329
  %378 = vmatprep.subr.mxu0 %v328
  %379 = vmatpush1.msra.mxu0 %v327
  %380 = vmatprep.subr.mxu0 0.0
  %381 = vmatpush2.msra.mxu0 0.0
  %382 = vmatprep.subr.mxu0 0.0
  %383 = vmatpush2.msra.mxu0 0.0
  %384 = vmatprep.subr.mxu0 0.0
  %385 = vmatpush2.msra.mxu0 0.0
  %386 = vmatprep.subr.mxu0 0.0
  %387 = vmatpush2.msra.mxu0 0.0
  %388 = vmatprep.subr.mxu0 0.0
  %389 = vmatpush2.msra.mxu0 0.0
  %390 = vmatprep.subr.mxu0 0.0
  %391 = vmatpush2.msra.mxu0 0.0
  %392 = vmatprep.subr.mxu0 0.0
  %393 = vmatpush2.msra.mxu0 0.0
  %394 = vmatprep.subr.mxu0 0.0
  %395 = vmatpush2.msra.mxu0 0.0
  %396 = vmatprep.subr.mxu0 0.0
  %397 = vmatpush2.msra.mxu0 0.0
  %398 = vmatprep.subr.mxu0 0.0
  %399 = vmatpush2.msra.mxu0 0.0
  %400 = vmatprep.subr.mxu0 0.0
  %401 = vmatpush2.msra.mxu0 0.0
  %402 = vmatprep.subr.mxu0 0.0
  %403 = vmatpush2.msra.mxu0 0.0
  %404 = vmatprep.subr.mxu0 0.0
  %405 = vmatpush2.msra.mxu0 0.0
  %406 = vmatprep.subr.mxu0 0.0
  %407 = vmatpush2.msra.mxu0 0.0
  %408 = vmatprep.subr.mxu0 0.0
  %409 = vmatpush2.msra.mxu0 0.0
  %410 = vmatprep.subr.mxu0 0.0
  %411 = vmatpush2.msra.mxu0 0.0
  %412 = vmatprep.mubr.f32.mxu0 0.0
  %413 = vmatmul.mubr.f32.gmra.mxu0 %v346
  %v414 = vpop.f32.mrf.mxu0
  %v415 = vadd.f32 0.0, %v414
  %v416 = vpop.f32.mrf.mxu0
  %v417 = vadd.f32 0.0, %v416
  %418 = vdwg.mxu0
  %v419 = vadd.f32 %v415, %v417
  %420 = vadd.xlane.f32.xlu0 %v419
  %v421 = vpop.xlane.xlu0 %420
  %v422 = vmul.f32 %v421, 0.00390625
  %v423 = vmul.f32 %v415, %v415
  %v424 = vmul.f32 %v417, %v417
  %v425 = vadd.f32 %v423, %v424
  %426 = vadd.xlane.f32.xlu0 %v425
  %v427 = vpop.xlane.xlu0 %426
  %v428 = vmul.f32 %v427, 0.00390625
  %v429 = vmul.f32 %v422, %v422
  %v430 = vsub.f32 %v428, %v429
  %v431 = vmax.f32 %v430, 0.0
  %v432 = vsub.f32 %v415, %v422
  %v433 = vsub.f32 %v417, %v422
  %v434 = vadd.f32 %v431, 1e-05
  %v435 = vrsqrt.pop %v434
  %v436 = vmul.f32 %v432, %v435
  %v437 = vmul.f32 %v433, %v435
  %v438 = vadd.f32 %v436, %v14
  %v439 = vadd.f32 %v437, %v15
  %440 = vst [vmem:[%s3] sm:$0xff] %v438
  %441 = vst [vmem:[%s3 + $0x8] sm:$0xff] %v439
  // Predicated region
  $region14: #{resblock.1} parent=0 // pred_check
    _
  $region15: #{resblock.1} parent=0 // pred_check_branch
    %443 = sbr.rel (0) target = $region17
  $region16: #{resblock.1} parent=0 // pred_region
    _
  $region17: #{resblock.1} parent=0 // pred_fallthru
    _
  // Predicated region
  $region18: #{resblock.1} parent=0 // pred_check
    _
  $region19: #{resblock.1} parent=0 // pred_check_branch
    %445 = sbr.rel (0) target = $region21
  $region20: #{resblock.1} parent=0 // pred_region
    _
  $region21: #{resblock.1} parent=0 // pred_fallthru
    _

</llo_original>
